<compile_context>
chip_gen: v5e
topology: v5e:2x2
jax: 0.10.0
libtpu: 0.0.40
codegen_flags: <defaults>
</compile_context>

<pallas_src>
import math

import jax
import jax.numpy as jnp
from jax.experimental import pallas as pl
from jax.experimental.pallas import tpu as pltpu


def _eca_kernel(w_ref, x_ref, o_ref):
    # w_ref: SMEM (1, k) f32 Conv1d weight.
    # x_ref / o_ref: VMEM (nb, C, H*W) blocks.
    _, c, hw = x_ref.shape
    k = w_ref.shape[1]
    pad = (k - 1) // 2

    x = x_ref[...]                                   # single read, reused below

    # AdaptiveAvgPool2d(1): mean over the flattened spatial (lane) axis,
    # accumulated in f32 without materializing a full-tile f32 copy.
    mean = jnp.sum(x, axis=-1, dtype=jnp.float32) * (1.0 / hw)   # (nb, C)

    # Conv1d(1, 1, k, padding=(k-1)//2, bias=False) across the channel axis.
    # Tiny O(k*C) scalar work; off the streaming critical path.
    padded = jnp.pad(mean, ((0, 0), (pad, pad)))
    y = jnp.zeros_like(mean)
    for j in range(k):  # k is a small static python int
        y = y + w_ref[0, j] * padded[:, j:j + c]

    # Sigmoid gate, cast to the input dtype so the rescale stays in x's dtype.
    gate = jax.nn.sigmoid(y).astype(x.dtype)         # (nb, C)
    o_ref[...] = (x * gate[:, :, None]).astype(o_ref.dtype)


def _pick_batch_block(n, bytes_per_item, target_bytes):
    """Largest divisor nb of n with nb*bytes <= target, preferring >=2 grid steps."""
    candidates = [d for d in range(1, n + 1)
                  if n % d == 0 and d * bytes_per_item <= target_bytes]
    if not candidates:
        return 1
    multi = [d for d in candidates if n // d >= 2]
    return max(multi) if multi else max(candidates)


def eca_block(x, conv_weight, *, target_block_bytes=4 << 20, donate_input=False):
    """x: (N, C, H, W); conv_weight: (1, k) f32 (Conv1d weight, squeezed)."""
    n, c, h, w = x.shape
    hw = h * w
    x2 = x.reshape(n, c, hw)                         # lane-dense last axis

    bytes_per_item = c * hw * x.dtype.itemsize
    nb = _pick_batch_block(n, bytes_per_item, target_block_bytes)
    grid = (n // nb,)

    # in + out blocks, double-buffered, plus slack; clamp to a budget that fits
    # every generation (v7x has 64 MiB physical VMEM per TensorCore).
    # Note: single elements much larger than ~8 MiB would want a channel-tiled
    # two-pass (mean pass + rescale pass) variant instead of whole-C blocks.
    needed = 4 * nb * bytes_per_item + (1 << 20)
    vmem_limit = int(min(max(needed, 32 << 20), 64 << 20))

    kwargs = {}
    if donate_input:
        kwargs["input_output_aliases"] = {1: 0}      # rescale x in place

    out = pl.pallas_call(
        _eca_kernel,
        out_shape=jax.ShapeDtypeStruct((n, c, hw), x.dtype),
        grid=grid,
        in_specs=[
            pl.BlockSpec(memory_space=pltpu.SMEM),             # conv weight
            pl.BlockSpec((nb, c, hw), lambda i: (i, 0, 0)),    # nb batch items
        ],
        out_specs=pl.BlockSpec((nb, c, hw), lambda i: (i, 0, 0)),
        compiler_params=pltpu.CompilerParams(
            dimension_semantics=("parallel",),
            vmem_limit_bytes=vmem_limit),
        **kwargs,
    )(conv_weight, x2)
    return out.reshape(n, c, h, w)


def _eca_kernel_size(channel, b=1, gamma=2):
    k = int(abs((math.log(channel, 2) + b) / gamma))
    return k if k % 2 else k + 1


def _reference(x, conv_weight):
    # Pure-JAX reference mirroring the PyTorch forward.
    mean = jnp.mean(x, axis=(2, 3))                  # (N, C)
    k = conv_weight.shape[1]
    pad = (k - 1) // 2
    padded = jnp.pad(mean, ((0, 0), (pad, pad)))
    c = x.shape[1]
    y = sum(conv_weight[0, j] * padded[:, j:j + c] for j in range(k))
    y = jax.nn.sigmoid(y)
    return x * y[:, :, None, None]


if __name__ == "__main__":
    # channel=16 -> kernel_size = 3 (matches the PyTorch __init__ formula)
    N, C, H, W = 2, 16, 16, 16
    k = _eca_kernel_size(C)  # == 3

    key = jax.random.PRNGKey(0)
    kx, kw = jax.random.split(key)
    x = jax.random.normal(kx, (N, C, H, W), dtype=jnp.float32)
    # Deterministic synthetic Conv1d weight, shape (out=1, in=1, k) -> (1, k).
    bound = 1.0 / math.sqrt(k)
    conv_weight = jax.random.uniform(
        kw, (1, k), dtype=jnp.float32, minval=-bound, maxval=bound)

    out = eca_block(x, conv_weight)
    jax.block_until_ready(out)

    ref = _reference(x, conv_weight)
    assert jnp.allclose(out, ref, atol=1e-5, rtol=1e-5)

    print("KERNEL_OK")
</pallas_src>

<mosaic_0001>
module attributes {stable_mosaic.version = 11 : i64} {
  func.func @_eca_kernel(%arg0: i32, %arg1: memref<1x3xf32, #tpu.memory_space<smem>>, %arg2: memref<1x16x256xf32, #tpu.memory_space<vmem>>, %arg3: memref<1x16x256xf32, #tpu.memory_space<vmem>>) attributes {dimension_semantics = [#tpu.dimension_semantics<parallel>], iteration_bounds = array<i64: 2>, scalar_prefetch = 0 : i64, scratch_operands = 0 : i64, tpu.core_type = #tpu.core_type<tc>, window_params = [{transform_indices = @transform_0, window_bounds = array<i64: 1, 3>}, {transform_indices = @transform_1, window_bounds = array<i64: 1, 16, 256>}, {transform_indices = @transform_2, window_bounds = array<i64: 1, 16, 256>}]} {
    %c0 = arith.constant 0 : index
    %c0_0 = arith.constant 0 : index
    %c0_1 = arith.constant 0 : index
    %0 = vector.load %arg2[%c0, %c0_0, %c0_1] : memref<1x16x256xf32, #tpu.memory_space<vmem>>, vector<1x16x256xf32>
    %cst = arith.constant dense<0.000000e+00> : vector<1x16xf32>
    %1 = vector.multi_reduction <add>, %0, %cst [2] : vector<1x16x256xf32> to vector<1x16xf32>
    %cst_2 = arith.constant 3.906250e-03 : f32
    %2 = vector.broadcast %cst_2 : f32 to vector<1x16xf32>
    %3 = arith.mulf %1, %2 : vector<1x16xf32>
    %c0_i32 = arith.constant 0 : i32
    %4 = arith.sitofp %c0_i32 : i32 to f32
    %5 = vector.broadcast %4 : f32 to vector<1x1xf32>
    %6 = tpu.concatenate %5, %3 in 1 : vector<1x1xf32>, vector<1x16xf32> -> vector<1x17xf32>
    %7 = vector.broadcast %4 : f32 to vector<1x1xf32>
    %8 = tpu.concatenate %6, %7 in 1 : vector<1x17xf32>, vector<1x1xf32> -> vector<1x18xf32>
    %cst_3 = arith.constant 0.000000e+00 : f32
    %9 = vector.broadcast %cst_3 : f32 to vector<1x16xf32>
    %c0_4 = arith.constant 0 : index
    %c0_5 = arith.constant 0 : index
    %10 = memref.load %arg1[%c0_4, %c0_5] : memref<1x3xf32, #tpu.memory_space<smem>>
    %11 = vector.extract_strided_slice %8 {offsets = [0, 0], sizes = [1, 16], strides = [1, 1]} : vector<1x18xf32> to vector<1x16xf32>
    %12 = vector.broadcast %10 : f32 to vector<1x16xf32>
    %13 = arith.mulf %12, %11 : vector<1x16xf32>
    %14 = arith.addf %9, %13 : vector<1x16xf32>
    %c0_6 = arith.constant 0 : index
    %c1 = arith.constant 1 : index
    %15 = memref.load %arg1[%c0_6, %c1] : memref<1x3xf32, #tpu.memory_space<smem>>
    %16 = vector.extract_strided_slice %8 {offsets = [0, 1], sizes = [1, 16], strides = [1, 1]} : vector<1x18xf32> to vector<1x16xf32>
    %17 = vector.broadcast %15 : f32 to vector<1x16xf32>
    %18 = arith.mulf %17, %16 : vector<1x16xf32>
    %19 = arith.addf %14, %18 : vector<1x16xf32>
    %c0_7 = arith.constant 0 : index
    %c2 = arith.constant 2 : index
    %20 = memref.load %arg1[%c0_7, %c2] : memref<1x3xf32, #tpu.memory_space<smem>>
    %21 = vector.extract_strided_slice %8 {offsets = [0, 2], sizes = [1, 16], strides = [1, 1]} : vector<1x18xf32> to vector<1x16xf32>
    %22 = vector.broadcast %20 : f32 to vector<1x16xf32>
    %23 = arith.mulf %22, %21 : vector<1x16xf32>
    %24 = arith.addf %19, %23 : vector<1x16xf32>
    %25 = arith.negf %24 : vector<1x16xf32>
    %26 = math.exp %25 : vector<1x16xf32>
    %cst_8 = arith.constant 1.000000e+00 : f32
    %27 = vector.broadcast %cst_8 : f32 to vector<1x16xf32>
    %28 = arith.addf %27, %26 : vector<1x16xf32>
    %29 = arith.divf %27, %28 : vector<1x16xf32>
    %30 = vector.shape_cast %29 : vector<1x16xf32> to vector<1x16x1xf32>
    %31 = vector.broadcast %30 : vector<1x16x1xf32> to vector<1x16x256xf32>
    %32 = arith.mulf %0, %31 : vector<1x16x256xf32>
    %c0_9 = arith.constant 0 : index
    %c0_10 = arith.constant 0 : index
    %c0_11 = arith.constant 0 : index
    %33 = vector.load %arg3[%c0_9, %c0_10, %c0_11] : memref<1x16x256xf32, #tpu.memory_space<vmem>>, vector<1x16x256xf32>
    tpu.vector_store %arg3[%c0_9, %c0_10, %c0_11], %32 {strides = array<i32>} : memref<1x16x256xf32, #tpu.memory_space<vmem>>, vector<1x16x256xf32>,
    return
  }
  func.func @transform_0(%arg0: i32) -> (i32, i32) {
    %c0_i32 = arith.constant 0 : i32
    %c0_i32_0 = arith.constant 0 : i32
    %c0_i32_1 = arith.constant 0 : i32
    return %c0_i32, %c0_i32_0 : i32, i32
  }
  func.func @transform_1(%arg0: i32) -> (i32, i32, i32) {
    %c0_i32 = arith.constant 0 : i32
    %c0_i32_0 = arith.constant 0 : i32
    %c0_i32_1 = arith.constant 0 : i32
    return %arg0, %c0_i32, %c0_i32_0 : i32, i32, i32
  }
  func.func @transform_2(%arg0: i32) -> (i32, i32, i32) {
    %c0_i32 = arith.constant 0 : i32
    %c0_i32_0 = arith.constant 0 : i32
    %c0_i32_1 = arith.constant 0 : i32
    return %arg0, %c0_i32, %c0_i32_0 : i32, i32, i32
  }
}

</mosaic_0001>

<llo_original>
// kernel: tpu_custom_call.1
$region0: #{tpu_custom_call.1}
  #allocation0 [shape = 'u32[]', space=smem, size = 0x4, offset = 0x4, fixed_abs, tag = 'smem constant byte address 0x4 - core index']
  #allocation1 [shape = 'u32[72,128]{1,0:T(1,128)}', space=vmem, size = 0x9000, scoped, tag = 'internal scratch']
  %s0 = inlined_call_operand.hbm [shape: f32[1,3], index: 0, kind: input, shape index: {}]
  %s1 = inlined_call_operand.hbm [shape: f32[2,16,256], index: 1, kind: input, shape index: {}]
  %s2 = inlined_call_operand.hbm [shape: f32[2,16,256], index: 2, kind: output, shape index: {}]
  %s3 = sld [smem:[#allocation0]]
  $region49: #{tpu_custom_call.1} parent=0
    _
  %s5 = ssub.s32 1, %s3
  %s6 = scalar_select 0, %s5, %s3
  $region1: #{tpu_custom_call.1} parent=0
    #allocation2 [shape = 'u8[512]{0}', space=smem, size = 0x200, scoped, tag = 'input window, operand 0, single buffered']
    #allocation3 [shape = 's32[2]{0}', space=sflag, size = 0x8, scoped, tag = 'scoped memory for tpu_custom_call.1']
    #allocation4 [shape = 's32[2]{0}', space=sflag, size = 0x8, scoped, tag = 'scoped memory for tpu_custom_call.1']
    #allocation5 [shape = 's32[2]{0}', space=sflag, size = 0x8, scoped, tag = 'scoped memory for tpu_custom_call.1']
    #allocation6 [shape = 'u8[32768]{0}', space=vmem, size = 0x8000, scoped, tag = 'input window, operand 1']
    #allocation7 [shape = 'u8[32768]{0}', space=vmem, size = 0x8000, scoped, tag = 'output window, operand 0']
    %7 = vsyncpa [#allocation5], 0
    %8 = vsyncpa [#allocation3], 0
    %s9 = scalar_lea.sflag [#allocation3], 1
    %10 = vsyncpa %s9, 0
    %11 = vsyncpa [#allocation4], 0
    %s12 = scalar_lea.sflag [#allocation4], 1
    %13 = vsyncpa %s12, 0
    loop: start=0, step=1, limit=4
    $region2: #{tpu_custom_call.1} parent=1 // loop_pre_header
      _
    $region3: #{tpu_custom_call.1} parent=1 // loop_header
      %s15 = sphi 0, %s19
      %p16 = scmp.ge.s32.totalorder %s15, 4
      %s23 = sphi 0, %s23
      %s25 = sphi 0, %s23
      %s26 = sphi 0, %s25
      %s40 = sphi 0, %s26
      %s46 = sphi 0, %s48
      %s49 = sphi 0, %s46
      %s50 = sphi 0, %s49
      %s66 = sphi 0, %s50
      %s72 = sphi 0, %s74
      %s75 = sphi 0, %s72
      %s76 = sphi 0, %s75
      %s92 = sphi 0, %s76
    $region4: #{tpu_custom_call.1} parent=1 // loop_header_branch
      %18 = sbr.rel (%p16) target = $region8
    $region5: #{tpu_custom_call.1} parent=1 // loop_body
      %s20 = ssub.s32 %s15, 1
      %s21 = ssub.s32 %s15, 2
      %s22 = sadd.s32 %s15, 1
      %s24 = sadd.s32 %s23, 1
      %p27 = scmp.eq.s32.totalorder %s15, 1
      %p28 = scmp.ne.s32.totalorder %s23, %s25
      %p29 = scmp.eq.s32.totalorder %s15, 0
      %p30 = por %p28, %p29
      %p31 = scmp.ne.s32.totalorder %s23, %s25
      %p32 = scmp.eq.s32.totalorder %s20, 1
      %p33 = por %p31, %p32
      %p34 = scmp.ne.s32.totalorder %s25, %s26
      %p35 = scmp.eq.s32.totalorder %s20, 0
      %p36 = por %p34, %p35
      %p37 = scmp.ne.s32.totalorder %s25, %s26
      %p38 = scmp.eq.s32.totalorder %s21, 1
      %p39 = por %p37, %p38
      %p41 = scmp.ne.s32.totalorder %s26, %s40
      %p42 = scmp.eq.s32.totalorder %s21, 0
      %p43 = por %p41, %p42
      %s44 = ssub.s32 %s15, %s22
      %p45 = scmp.eq.s32.totalorder %s44, 0
      %s47 = sadd.s32 %s46, 1
      %s48 = scalar_select %p45, %s46, %s47
      %p51 = pneg %p45
      %p52 = scmp.eq.s32.totalorder %s15, 1
      %p53 = por %p51, %p52
      %p54 = scmp.ne.s32.totalorder %s46, %s49
      %p55 = scmp.eq.s32.totalorder %s15, 0
      %p56 = por %p54, %p55
      %p57 = scmp.ne.s32.totalorder %s46, %s49
      %p58 = scmp.eq.s32.totalorder %s20, 1
      %p59 = por %p57, %p58
      %p60 = scmp.ne.s32.totalorder %s49, %s50
      %p61 = scmp.eq.s32.totalorder %s20, 0
      %p62 = por %p60, %p61
      %p63 = scmp.ne.s32.totalorder %s49, %s50
      %p64 = scmp.eq.s32.totalorder %s21, 1
      %p65 = por %p63, %p64
      %p67 = scmp.ne.s32.totalorder %s50, %s66
      %p68 = scmp.eq.s32.totalorder %s21, 0
      %p69 = por %p67, %p68
      %s70 = ssub.s32 %s15, %s22
      %p71 = scmp.eq.s32.totalorder %s70, 0
      %s73 = sadd.s32 %s72, 1
      %s74 = scalar_select %p71, %s72, %s73
      %p77 = pneg %p71
      %p78 = scmp.eq.s32.totalorder %s15, 1
      %p79 = por %p77, %p78
      %p80 = scmp.ne.s32.totalorder %s72, %s75
      %p81 = scmp.eq.s32.totalorder %s15, 0
      %p82 = por %p80, %p81
      %p83 = scmp.ne.s32.totalorder %s72, %s75
      %p84 = scmp.eq.s32.totalorder %s20, 1
      %p85 = por %p83, %p84
      %p86 = scmp.ne.s32.totalorder %s75, %s76
      %p87 = scmp.eq.s32.totalorder %s20, 0
      %p88 = por %p86, %p87
      %p89 = scmp.ne.s32.totalorder %s75, %s76
      %p90 = scmp.eq.s32.totalorder %s21, 1
      %p91 = por %p89, %p90
      %p93 = scmp.ne.s32.totalorder %s76, %s92
      %p94 = scmp.eq.s32.totalorder %s21, 0
      %p95 = por %p93, %p94
      %p96 = scmp.le.s32.totalorder 1, %s15
      %p97 = scmp.lt.s32.totalorder %s15, 3
      %p98 = pnand %p96, %p97
      %p99 = pneg %p98
      // Predicated region
      $region9: #{tpu_custom_call.1} parent=5 // pred_check
        _
      $region10: #{tpu_custom_call.1} parent=5 // pred_check_branch
        %101 = sbr.rel (%p98) target = $region12
      $region11: #{tpu_custom_call.1} parent=5 // pred_region
        %s102 = ssub.s32 %s15, 1
        // Predicated region
        $region13: #{tpu_custom_call.1} parent=11 // pred_check
          %p103 = pneg %p36
        $region14: #{tpu_custom_call.1} parent=11 // pred_check_branch
          %105 = sbr.rel (%p103) target = $region16
        $region15: #{tpu_custom_call.1} parent=11 // pred_region
          %107 = vsyncadd [#allocation5], 0
          %s109 = sshll.u32 %s0, 4
          %s110 = int_to_ptr.hbm [resolvable:$true] %s109
          %112 = dma.hbm_to_smem %s110, 16, [#allocation2], [#allocation5]
        $region16: #{tpu_custom_call.1} parent=11 // pred_fallthru
          _
      $region12: #{tpu_custom_call.1} parent=5 // pred_fallthru
        _
      %p113 = scmp.lt.s32.totalorder %s15, 2
      // Predicated region
      $region17: #{tpu_custom_call.1} parent=5 // pred_check
        %p114 = pneg %p113
      $region18: #{tpu_custom_call.1} parent=5 // pred_check_branch
        %116 = sbr.rel (%p114) target = $region20
      $region19: #{tpu_custom_call.1} parent=5 // pred_region
        // Predicated region
        $region21: #{tpu_custom_call.1} parent=19 // pred_check
          %p117 = pneg %p56
        $region22: #{tpu_custom_call.1} parent=19 // pred_check_branch
          %119 = sbr.rel (%p117) target = $region24
        $region23: #{tpu_custom_call.1} parent=19 // pred_region
          %s120 = sand.u32 %s46, 1
          %s121 = scalar_lea.sflag [#allocation3], %s120
          %s122 = sand.u32 %s46, 1
          %s123 = smul.addr %s122, 32
          %s124 = scalar_lea.vmem [#allocation6], %s123
          %126 = vsyncadd %s121, 0
          %s127 = smul.addr %s15, 4
          %s128 = smul.addr %s127, 8
          %s129 = scalar_lea.hbm %s1, %s128
          %s130 = sshll.u32 %s129, 4
          %s131 = int_to_ptr.hbm [resolvable:$true] %s130
          %s132 = sshll.u32 %s124, 4
          %s133 = int_to_ptr.vmem [resolvable:$true] %s132
          %138 = dma.hbm_to_vmem [thread:$0]  %s131, 512, %s133, %s121, 256, 256, 16
        $region24: #{tpu_custom_call.1} parent=19 // pred_fallthru
          _
      $region20: #{tpu_custom_call.1} parent=5 // pred_fallthru
        _
      %p139 = scmp.le.s32.totalorder 1, %s15
      %p140 = scmp.lt.s32.totalorder %s15, 3
      %p141 = pnand %p139, %p140
      %p142 = pneg %p141
      // Predicated region
      $region25: #{tpu_custom_call.1} parent=5 // pred_check
        _
      $region26: #{tpu_custom_call.1} parent=5 // pred_check_branch
        %144 = sbr.rel (%p141) target = $region28
      $region27: #{tpu_custom_call.1} parent=5 // pred_region
        %s145 = ssub.s32 %s15, 1
        // Predicated region
        $region29: #{tpu_custom_call.1} parent=27 // pred_check
          %p146 = pneg %p36
        $region30: #{tpu_custom_call.1} parent=27 // pred_check_branch
          %148 = sbr.rel (%p146) target = $region32
        $region31: #{tpu_custom_call.1} parent=27 // pred_region
          %150 = dma.done [#allocation5], 16
        $region32: #{tpu_custom_call.1} parent=27 // pred_fallthru
          _
        %s151 = sand.u32 %s49, 1
        %s152 = scalar_lea.sflag [#allocation3], %s151
        %s153 = sand.u32 %s49, 1
        %s154 = smul.addr %s153, 32
        %s155 = scalar_lea.vmem [#allocation6], %s154
        // Predicated region
        $region33: #{tpu_custom_call.1} parent=27 // pred_check
          %p156 = pneg %p62
        $region34: #{tpu_custom_call.1} parent=27 // pred_check_branch
          %158 = sbr.rel (%p156) target = $region36
        $region35: #{tpu_custom_call.1} parent=27 // pred_region
          %160 = dma.done %s152, 512
        $region36: #{tpu_custom_call.1} parent=27 // pred_fallthru
          _
        %161 = sfence
        %p162 = pneg %p36
        %p163 = pneg %p33
        %s164 = sand.u32 %s49, 1
        %s165 = scalar_lea.sflag [#allocation3], %s164
        %s166 = sand.u32 %s49, 1
        %s167 = smul.addr %s166, 32
        %s168 = scalar_lea.vmem [#allocation6], %s167
        %p169 = pneg %p62
        %p170 = pneg %p59
        %p171 = pneg %p88
        %p172 = pneg %p85
        %s173 = sand.u32 %s75, 1
        %s174 = scalar_lea.sflag [#allocation4], %s173
        %s175 = sand.u32 %s75, 1
        %s176 = smul.addr %s175, 32
        %s177 = scalar_lea.vmem [#allocation7], %s176
        %v178 = vld [vmem:[%s155] sm:$0xff]
        %v179 = vld [vmem:[%s155 + $0x8] sm:$0xff]
        %v180 = vld [vmem:[%s155 + $0x10] sm:$0xff]
        %v181 = vld [vmem:[%s155 + $0x18] sm:$0xff]
        %v182 = vadd.f32 %v178, %v179
        %183 = vadd.xlane.f32.xlu0 %v182
        %v184 = vpop.xlane.xlu0 %183
        %v185 = vadd.f32 %v180, %v181
        %186 = vadd.xlane.f32.xlu0 %v185
        %v187 = vpop.xlane.xlu0 %186
        %v188 = vmul.f32 %v184, 0.00390625
        %v189 = vmul.f32 %v187, 0.00390625
        %v192 = vlaneseq
        %v193 = vand.u32 %v192, 127
        %v194 = vadd.s32 %v193, 4294967295
        %v195 = vperm.slane %v188, %v194
        %v196 = vadd.s32 %v193, 4294967287
        %v197 = vperm.slane %v189, %v196
        %vm198 = vcmask 138312
        %v199 = vsel %vm198, %v197, %v195
        %vm201 = vcmask 7168
        %v202 = vsel %vm201, 0.0, %v199
        %vm203 = vcmask 138240
        %v204 = vsel %vm203, %v202, 0.0
        %s205 = sld [smem:[#allocation2]]
        %v206 = vstv %s205
        %v207 = vmul.f32 %v206, %v204
        %v208 = vadd.f32 %v207, 0.0
        %s209 = sld [smem:[#allocation2 + $0x1]]
        %v210 = vstv %s209
        %v211 = vmul.f32 %v210, %v204
        %213 = vrot.lane.b32.xlu0 %v211, 127
        %v214 = vpop.permute.xlu0 %213
        %v216 = vadd.f32 %v208, %v214
        %s217 = sld [smem:[#allocation2 + $0x2]]
        %v218 = vstv %s217
        %v219 = vmul.f32 %v218, %v204
        %221 = vrot.lane.b32.xlu0 %v219, 126
        %v222 = vpop.permute.xlu0 %221
        %v224 = vadd.f32 %v216, %v222
        %v225 = vxor.u32 %v224, 2147483648
        %v226 = vmul.f32 %v225, 1.442695
        %v227 = vpow.pop %v226
        %v228 = vadd.f32 %v227, 1.0
        %v229 = vrcp.pop %v228
        %v230 = vmul.f32 %v228, %v229
        %v231 = vsub.f32 1.0, %v230
        %v232 = vmul.f32 %v229, %v231
        %v233 = vadd.f32 %v229, %v232
        %vm234 = vweird.f32 %v228
        %vm235 = vweird.f32 %v229
        %vm236 = vmor %vm234, %vm235
        %v237 = vsel %vm236, %v229, %v233
        %v238 = vand.u32 2147483647, %v228
        %vm239 = vcmp.eq.f32.partialorder %v238, 8.507059e+37
        %v240 = vand.u32 %v228, 2147483648
        %v241 = vor.u32 1.1754944e-38, %v240
        %v242 = vsel %vm239, %v241, %v237
        %v243 = vmul.f32 1.0, %v242
        %v244 = vperm.slane %v243, 0
        %v245 = vlaneseq
        %v246 = vshrl.u32 %v245, 7
        %248 = vset.pattern.permute.xlu0 %v246
        %249 = vperm.xlu0 %248, %v244
        %v250 = vpop.permute.xlu0 %249
        %v251 = vlaneseq
        %v252 = vshrl.u32 %v251, 7
        %v253 = vadd.s32 %v252, 8
        %254 = vset.pattern.permute.xlu0 %v253
        %255 = vperm.xlu0 %254, %v244
        %v256 = vpop.permute.xlu0 %255
        %v257 = vmul.f32 %v178, %v250
        %v258 = vmul.f32 %v179, %v250
        %v259 = vmul.f32 %v180, %v256
        %v260 = vmul.f32 %v181, %v256
        %261 = vst [vmem:[%s177] sm:$0xff] %v257
        %262 = vst [vmem:[%s177 + $0x8] sm:$0xff] %v258
        %263 = vst [vmem:[%s177 + $0x10] sm:$0xff] %v259
        %264 = vst [vmem:[%s177 + $0x18] sm:$0xff] %v260
        %s265 = sand.u32 %s75, 1
        %s266 = scalar_lea.sflag [#allocation4], %s265
        %s267 = sand.u32 %s75, 1
        %s268 = smul.addr %s267, 32
        %s269 = scalar_lea.vmem [#allocation7], %s268
        // Predicated region
        $region37: #{tpu_custom_call.1} parent=27 // pred_check
          %p270 = pneg %p85
        $region38: #{tpu_custom_call.1} parent=27 // pred_check_branch
          %272 = sbr.rel (%p270) target = $region40
        $region39: #{tpu_custom_call.1} parent=27 // pred_region
          %274 = vsyncadd %s266, 0
          %s275 = smul.addr %s20, 4
          %s276 = smul.addr %s275, 8
          %s277 = scalar_lea.hbm %s2, %s276
          %s278 = sshll.u32 %s269, 4
          %s279 = int_to_ptr.vmem [resolvable:$true] %s278
          %s280 = sshll.u32 %s277, 4
          %s281 = int_to_ptr.hbm [resolvable:$true] %s280
          %286 = dma.vmem_to_hbm [thread:$0]  %s279, 512, %s281, %s266, 256, 256, 16
        $region40: #{tpu_custom_call.1} parent=27 // pred_fallthru
          _
      $region28: #{tpu_custom_call.1} parent=5 // pred_fallthru
        _
      %p287 = scmp.le.s32.totalorder 2, %s15
      // Predicated region
      $region41: #{tpu_custom_call.1} parent=5 // pred_check
        %p288 = pneg %p287
      $region42: #{tpu_custom_call.1} parent=5 // pred_check_branch
        %290 = sbr.rel (%p288) target = $region44
      $region43: #{tpu_custom_call.1} parent=5 // pred_region
        %s291 = ssub.s32 %s15, 2
        // Predicated region
        $region45: #{tpu_custom_call.1} parent=43 // pred_check
          %p292 = pneg %p91
        $region46: #{tpu_custom_call.1} parent=43 // pred_check_branch
          %294 = sbr.rel (%p292) target = $region48
        $region47: #{tpu_custom_call.1} parent=43 // pred_region
          %s295 = sand.u32 %s76, 1
          %s296 = scalar_lea.sflag [#allocation4], %s295
          %s297 = sand.u32 %s76, 1
          %s298 = smul.addr %s297, 32
          %s299 = scalar_lea.vmem [#allocation7], %s298
          %301 = dma.done %s296, 512
        $region48: #{tpu_custom_call.1} parent=43 // pred_fallthru
          _
      $region44: #{tpu_custom_call.1} parent=5 // pred_fallthru
        _
    $region6: #{tpu_custom_call.1} parent=1 // loop_footer
      %s19 = sadd.s32 1, %s15
    $region7: #{tpu_custom_call.1} parent=1 // loop_footer_branch
      %14 = sbr.rel target = $region3
    $region8: #{tpu_custom_call.1} parent=1 // loop_exit
      _
    %302 = vsyncpa [#allocation3], 1
    %s303 = scalar_lea.sflag [#allocation3], 1
    %304 = vsyncpa %s303, 1
    %305 = vsyncpa [#allocation4], 1
    %s306 = scalar_lea.sflag [#allocation4], 1
    %307 = vsyncpa %s306, 1
    %308 = vsyncpa [#allocation5], 1
    %s309 = scalar_lea.sflag [#allocation5], 1
    %310 = vsyncpa %s309, 1

</llo_original>
